<compile_context>
chip_gen: v7x
topology: tpu7x:2x2x1
jax: 0.10.0
libtpu: 0.0.40
codegen_flags: <defaults>
</compile_context>

<pallas_src>
import functools

import jax
import jax.numpy as jnp
from jax.experimental import pallas as pl
from jax.experimental.pallas import tpu as pltpu

_LANES = 128
_MAX_TILE_ROWS = 1024  # up to 512 KiB per f32 input tile -> ~2 MiB double-buffered


def _bce_dice_partial_kernel(x_ref, y_ref, out_ref, *, tile_rows, need_mask,
                             valid_rows, rem_lanes):
    x = x_ref[...].astype(jnp.float32)
    y = y_ref[...].astype(jnp.float32)

    s = jax.nn.sigmoid(x)
    # BCEWithLogits (PyTorch-stable form): max(x,0) - x*y + log1p(exp(-|x|)).
    # log1p(exp(-|x|)) == -log(sigmoid(|x|)) == -log(where(x >= 0, s, 1 - s)),
    # so we only pay one extra EUP op (log) on top of the sigmoid.
    bce = jnp.maximum(x, 0.0) - x * y - jnp.log(jnp.where(x >= 0.0, s, 1.0 - s))
    tp = y * s

    def emit(tp_q, s_q, y_q, bce_q):
        # Reduce (tile_rows, 128) -> (8, 128) with pure VPU adds (sublane-group sum);
        # cross-lane/sublane reduction is deferred to the wrapper.
        def red(q):
            return q.reshape(tile_rows // 8, 8, _LANES).sum(axis=0)

        out_ref[0, 0] = red(tp_q)    # sum(target * sigmoid)
        out_ref[0, 1] = red(s_q)     # sum(sigmoid)
        out_ref[0, 2] = red(y_q)     # sum(target)
        out_ref[0, 3] = red(bce_q)   # sum(per-element BCE)

    if need_mask:
        i = pl.program_id(0)
        last = pl.num_programs(0) - 1

        @pl.when(i == last)
        def _():
            # Only the final tile can contain padded / out-of-bounds elements.
            row = (jax.lax.broadcasted_iota(jnp.int32, (tile_rows, _LANES), 0)
                   + i * tile_rows)
            lane = jax.lax.broadcasted_iota(jnp.int32, (tile_rows, _LANES), 1)
            valid = (row < valid_rows) | ((row == valid_rows) & (lane < rem_lanes))
            zero = jnp.zeros_like(x)
            emit(jnp.where(valid, tp, zero),
                 jnp.where(valid, s, zero),
                 jnp.where(valid, y, zero),
                 jnp.where(valid, bce, zero))

        @pl.when(i != last)
        def _():
            emit(tp, s, y, bce)
    else:
        emit(tp, s, y, bce)


def bce_dice_loss(logit, target, *, eps=1e-7, beta=1.0, bce_weight=0.2,
                  max_tile_rows=_MAX_TILE_ROWS):
    assert logit.shape == target.shape
    n = int(logit.size)

    x = logit.reshape(-1)
    y = target.reshape(-1)

    # Only pad when the flat length is not a multiple of 8*128 (common NCHW image
    # sizes are already aligned, so usually this is a free reshape, not a copy).
    padded = pl.cdiv(n, 8 * _LANES) * (8 * _LANES)
    if padded != n:
        x = jnp.pad(x, (0, padded - n))
        y = jnp.pad(y, (0, padded - n))

    rows = padded // _LANES                      # multiple of 8
    x2 = x.reshape(rows, _LANES)
    y2 = y.reshape(rows, _LANES)

    tile_rows = min(max_tile_rows, rows)         # multiple of 8, <= rows
    num_tiles = pl.cdiv(rows, tile_rows)
    covered = num_tiles * tile_rows * _LANES
    need_mask = covered != n                     # padded zeros and/or ragged last tile
    valid_rows = n // _LANES
    rem_lanes = n % _LANES

    kernel = functools.partial(
        _bce_dice_partial_kernel,
        tile_rows=tile_rows, need_mask=need_mask,
        valid_rows=valid_rows, rem_lanes=rem_lanes)

    tile_spec = pl.BlockSpec((tile_rows, _LANES), lambda i: (i, 0))

    partials = pl.pallas_call(
        kernel,
        out_shape=jax.ShapeDtypeStruct((num_tiles, 4, 8, _LANES), jnp.float32),
        grid_spec=pltpu.PrefetchScalarGridSpec(
            num_scalar_prefetch=0,
            grid=(num_tiles,),
            in_specs=[tile_spec, tile_spec],
            out_specs=pl.BlockSpec((1, 4, 8, _LANES), lambda i: (i, 0, 0, 0)),
        ),
        compiler_params=pltpu.CompilerParams(
            dimension_semantics=("parallel",),
            vmem_limit_bytes=32 * 1024 * 1024),
    )(x2, y2)

    # Tiny cross-tile reduction + scalar finalize (O(num_tiles * 4KiB)).
    sums = jnp.sum(partials, axis=(0, 2, 3))
    tp, s_sum, y_sum, bce_sum = sums[0], sums[1], sums[2], sums[3]
    fp = s_sum - tp
    fn = y_sum - tp
    beta2 = beta * beta
    score = ((1.0 + beta2) * tp + eps) / ((1.0 + beta2) * tp + beta2 * fn + fp + eps)
    dice = 1.0 - score
    bce = bce_sum / n
    return dice + bce_weight * bce


def _reference_loss(logit, target, *, eps=1e-7, beta=1.0, bce_weight=0.2):
    x = logit.astype(jnp.float32)
    y = target.astype(jnp.float32)
    s = jax.nn.sigmoid(x)
    tp = jnp.sum(y * s)
    fp = jnp.sum(s) - tp
    fn = jnp.sum(y) - tp
    beta2 = beta * beta
    score = ((1.0 + beta2) * tp + eps) / ((1.0 + beta2) * tp + beta2 * fn + fp + eps)
    dice = 1.0 - score
    bce = jnp.mean(jnp.maximum(x, 0.0) - x * y + jnp.log1p(jnp.exp(-jnp.abs(x))))
    return dice + bce_weight * bce


if __name__ == "__main__":
    key = jax.random.PRNGKey(0)
    k1, k2, k3, k4, k5, k6 = jax.random.split(key, 6)

    # Primary demo: NCHW like PyTorch, batch=2, channels=4, spatial=16x16 (f32).
    logit = jax.random.normal(k1, (2, 4, 16, 16), dtype=jnp.float32)
    target = (jax.random.uniform(k2, (2, 4, 16, 16)) > 0.5).astype(jnp.float32)
    loss = jax.block_until_ready(bce_dice_loss(logit, target))
    ref = _reference_loss(logit, target)
    assert jnp.allclose(loss, ref, rtol=1e-4, atol=1e-6), (loss, ref)

    # Ragged case (element count not a multiple of 8*128) -> exercises in-kernel mask.
    logit_r = jax.random.normal(k3, (2, 3, 10, 10), dtype=jnp.float32)
    target_r = (jax.random.uniform(k4, (2, 3, 10, 10)) > 0.5).astype(jnp.float32)
    loss_r = jax.block_until_ready(bce_dice_loss(logit_r, target_r))
    ref_r = _reference_loss(logit_r, target_r)
    assert jnp.allclose(loss_r, ref_r, rtol=1e-4, atol=1e-6), (loss_r, ref_r)

    # Multi-tile case with bf16 logits (native-width streaming, ragged last tile).
    logit_b = jax.random.normal(k5, (2, 8, 128, 96), dtype=jnp.bfloat16)
    target_b = (jax.random.uniform(k6, (2, 8, 128, 96)) > 0.5).astype(jnp.float32)
    loss_b = jax.block_until_ready(bce_dice_loss(logit_b, target_b))
    ref_b = _reference_loss(logit_b, target_b)
    assert jnp.allclose(loss_b, ref_b, rtol=1e-4, atol=1e-5), (loss_b, ref_b)

    print("KERNEL_OK")
</pallas_src>

<mosaic_0001>
module attributes {stable_mosaic.version = 11 : i64} {
  func.func @_bce_dice_partial_kernel(%arg0: i32, %arg1: memref<16x128xf32, #tpu.memory_space<vmem>>, %arg2: memref<16x128xf32, #tpu.memory_space<vmem>>, %arg3: memref<1x4x8x128xf32, #tpu.memory_space<vmem>>) attributes {dimension_semantics = [#tpu.dimension_semantics<parallel>], iteration_bounds = array<i64: 1>, scalar_prefetch = 0 : i64, scratch_operands = 0 : i64, tpu.core_type = #tpu.core_type<tc>, window_params = [{transform_indices = @transform_0, window_bounds = array<i64: 16, 128>}, {transform_indices = @transform_1, window_bounds = array<i64: 16, 128>}, {transform_indices = @transform_2, window_bounds = array<i64: 1, 4, 8, 128>}]} {
    %c0 = arith.constant 0 : index
    %c0_0 = arith.constant 0 : index
    %0 = vector.load %arg1[%c0, %c0_0] : memref<16x128xf32, #tpu.memory_space<vmem>>, vector<16x128xf32>
    %c0_1 = arith.constant 0 : index
    %c0_2 = arith.constant 0 : index
    %1 = vector.load %arg2[%c0_1, %c0_2] : memref<16x128xf32, #tpu.memory_space<vmem>>, vector<16x128xf32>
    %2 = arith.negf %0 : vector<16x128xf32>
    %3 = math.exp %2 : vector<16x128xf32>
    %cst = arith.constant 1.000000e+00 : f32
    %4 = vector.broadcast %cst : f32 to vector<16x128xf32>
    %5 = arith.addf %4, %3 : vector<16x128xf32>
    %6 = arith.divf %4, %5 : vector<16x128xf32>
    %cst_3 = arith.constant 0.000000e+00 : f32
    %7 = vector.broadcast %cst_3 : f32 to vector<16x128xf32>
    %8 = arith.maximumf %0, %7 : vector<16x128xf32>
    %9 = arith.mulf %0, %1 : vector<16x128xf32>
    %10 = arith.subf %8, %9 : vector<16x128xf32>
    %cst_4 = arith.constant 0.000000e+00 : f32
    %11 = vector.broadcast %cst_4 : f32 to vector<16x128xf32>
    %12 = arith.cmpf oge, %0, %11 : vector<16x128xf32>
    %cst_5 = arith.constant 1.000000e+00 : f32
    %13 = vector.broadcast %cst_5 : f32 to vector<16x128xf32>
    %14 = arith.subf %13, %6 : vector<16x128xf32>
    %15 = arith.select %12, %6, %14 : vector<16x128xi1>, vector<16x128xf32>
    %16 = math.log %15 : vector<16x128xf32>
    %17 = arith.subf %10, %16 : vector<16x128xf32>
    %18 = arith.mulf %1, %6 : vector<16x128xf32>
    %19 = vector.shape_cast %18 : vector<16x128xf32> to vector<2x8x128xf32>
    %cst_6 = arith.constant dense<0.000000e+00> : vector<8x128xf32>
    %20 = vector.multi_reduction <add>, %19, %cst_6 [0] : vector<2x8x128xf32> to vector<8x128xf32>
    %c0_7 = arith.constant 0 : index
    %c0_8 = arith.constant 0 : index
    %c0_9 = arith.constant 0 : index
    %c0_10 = arith.constant 0 : index
    %21 = vector.load %arg3[%c0_7, %c0_8, %c0_9, %c0_10] : memref<1x4x8x128xf32, #tpu.memory_space<vmem>>, vector<1x1x8x128xf32>
    %22 = vector.shape_cast %21 : vector<1x1x8x128xf32> to vector<8x128xf32>
    %23 = vector.shape_cast %20 : vector<8x128xf32> to vector<1x1x8x128xf32>
    tpu.vector_store %arg3[%c0_7, %c0_8, %c0_9, %c0_10], %23 {strides = array<i32>} : memref<1x4x8x128xf32, #tpu.memory_space<vmem>>, vector<1x1x8x128xf32>,
    %24 = vector.shape_cast %6 : vector<16x128xf32> to vector<2x8x128xf32>
    %cst_11 = arith.constant dense<0.000000e+00> : vector<8x128xf32>
    %25 = vector.multi_reduction <add>, %24, %cst_11 [0] : vector<2x8x128xf32> to vector<8x128xf32>
    %c0_12 = arith.constant 0 : index
    %c1 = arith.constant 1 : index
    %c0_13 = arith.constant 0 : index
    %c0_14 = arith.constant 0 : index
    %26 = vector.load %arg3[%c0_12, %c1, %c0_13, %c0_14] : memref<1x4x8x128xf32, #tpu.memory_space<vmem>>, vector<1x1x8x128xf32>
    %27 = vector.shape_cast %26 : vector<1x1x8x128xf32> to vector<8x128xf32>
    %28 = vector.shape_cast %25 : vector<8x128xf32> to vector<1x1x8x128xf32>
    tpu.vector_store %arg3[%c0_12, %c1, %c0_13, %c0_14], %28 {strides = array<i32>} : memref<1x4x8x128xf32, #tpu.memory_space<vmem>>, vector<1x1x8x128xf32>,
    %29 = vector.shape_cast %1 : vector<16x128xf32> to vector<2x8x128xf32>
    %cst_15 = arith.constant dense<0.000000e+00> : vector<8x128xf32>
    %30 = vector.multi_reduction <add>, %29, %cst_15 [0] : vector<2x8x128xf32> to vector<8x128xf32>
    %c0_16 = arith.constant 0 : index
    %c2 = arith.constant 2 : index
    %c0_17 = arith.constant 0 : index
    %c0_18 = arith.constant 0 : index
    %31 = vector.load %arg3[%c0_16, %c2, %c0_17, %c0_18] : memref<1x4x8x128xf32, #tpu.memory_space<vmem>>, vector<1x1x8x128xf32>
    %32 = vector.shape_cast %31 : vector<1x1x8x128xf32> to vector<8x128xf32>
    %33 = vector.shape_cast %30 : vector<8x128xf32> to vector<1x1x8x128xf32>
    tpu.vector_store %arg3[%c0_16, %c2, %c0_17, %c0_18], %33 {strides = array<i32>} : memref<1x4x8x128xf32, #tpu.memory_space<vmem>>, vector<1x1x8x128xf32>,
    %34 = vector.shape_cast %17 : vector<16x128xf32> to vector<2x8x128xf32>
    %cst_19 = arith.constant dense<0.000000e+00> : vector<8x128xf32>
    %35 = vector.multi_reduction <add>, %34, %cst_19 [0] : vector<2x8x128xf32> to vector<8x128xf32>
    %c0_20 = arith.constant 0 : index
    %c3 = arith.constant 3 : index
    %c0_21 = arith.constant 0 : index
    %c0_22 = arith.constant 0 : index
    %36 = vector.load %arg3[%c0_20, %c3, %c0_21, %c0_22] : memref<1x4x8x128xf32, #tpu.memory_space<vmem>>, vector<1x1x8x128xf32>
    %37 = vector.shape_cast %36 : vector<1x1x8x128xf32> to vector<8x128xf32>
    %38 = vector.shape_cast %35 : vector<8x128xf32> to vector<1x1x8x128xf32>
    tpu.vector_store %arg3[%c0_20, %c3, %c0_21, %c0_22], %38 {strides = array<i32>} : memref<1x4x8x128xf32, #tpu.memory_space<vmem>>, vector<1x1x8x128xf32>,
    return
  }
  func.func @transform_0(%arg0: i32) -> (i32, i32) {
    %c0_i32 = arith.constant 0 : i32
    %c0_i32_0 = arith.constant 0 : i32
    return %arg0, %c0_i32 : i32, i32
  }
  func.func @transform_1(%arg0: i32) -> (i32, i32) {
    %c0_i32 = arith.constant 0 : i32
    %c0_i32_0 = arith.constant 0 : i32
    return %arg0, %c0_i32 : i32, i32
  }
  func.func @transform_2(%arg0: i32) -> (i32, i32, i32, i32) {
    %c0_i32 = arith.constant 0 : i32
    %c0_i32_0 = arith.constant 0 : i32
    %c0_i32_1 = arith.constant 0 : i32
    %c0_i32_2 = arith.constant 0 : i32
    return %arg0, %c0_i32, %c0_i32_0, %c0_i32_1 : i32, i32, i32, i32
  }
}

</mosaic_0001>

<llo_original>
// kernel: tpu_custom_call.1
$region0: #{tpu_custom_call.1}
  #allocation0 [shape = 'u32[]', space=smem, size = 0x4, offset = 0x4, fixed_abs, tag = 'smem constant byte address 0x4 - core index']
  #allocation1 [shape = 'u32[144,128]{1,0:T(1,128)}', space=vmem, size = 0x12000, scoped, tag = 'internal scratch']
  %s0 = inlined_call_operand.hbm [shape: f32[16,128], index: 0, kind: input, shape index: {}]
  %s1 = inlined_call_operand.hbm [shape: f32[16,128], index: 1, kind: input, shape index: {}]
  %s2 = inlined_call_operand.hbm [shape: f32[1,4,8,128], index: 2, kind: output, shape index: {}]
  %s3 = sld [smem:[#allocation0]]
  $region26: #{tpu_custom_call.1} parent=0
    _
  %s5 = ssub.s32 1, %s3
  %s6 = scalar_select 0, %s5, %s3
  $region1: #{tpu_custom_call.1} parent=0
    #allocation2 [shape = 'u8[8192]{0}', space=vmem, size = 0x2000, scoped, tag = 'input window, operand 0, single buffered']
    #allocation3 [shape = 's32[1]{0}', space=sflag, size = 0x4, scoped, tag = 'scoped memory for tpu_custom_call.1']
    #allocation4 [shape = 's32[1]{0}', space=sflag, size = 0x4, scoped, tag = 'scoped memory for tpu_custom_call.1']
    #allocation5 [shape = 'u8[8192]{0}', space=vmem, size = 0x2000, scoped, tag = 'input window, operand 1, single buffered']
    #allocation6 [shape = 's32[1]{0}', space=sflag, size = 0x4, scoped, tag = 'scoped memory for tpu_custom_call.1']
    #allocation7 [shape = 'u8[16384]{0}', space=vmem, size = 0x4000, scoped, tag = 'output window, operand 0, single buffered']
    %7 = vsyncpa [#allocation3], 0
    %8 = vsyncpa [#allocation6], 0
    %9 = vsyncpa [#allocation4], 0
    // Predicated region
    $region2: #{tpu_custom_call.1} parent=1 // pred_check
      _
    $region3: #{tpu_custom_call.1} parent=1 // pred_check_branch
      %11 = sbr.rel (0) target = $region5
    $region4: #{tpu_custom_call.1} parent=1 // pred_region
      %s13 = ssub.s32 256, 256
      %14 = vsyncadd [#allocation3], %s13
      %s15 = sshll.u32 [#allocation2], 4
      %s16 = int_to_ptr.vmem [resolvable:$true] %s15
      %21 = dma.hbm_to_vmem [thread:$0]  %s0, 256, %s16, [#allocation3], 128, 128, 8
    $region5: #{tpu_custom_call.1} parent=1 // pred_fallthru
      _
    // Predicated region
    $region6: #{tpu_custom_call.1} parent=1 // pred_check
      _
    $region7: #{tpu_custom_call.1} parent=1 // pred_check_branch
      %23 = sbr.rel (0) target = $region9
    $region8: #{tpu_custom_call.1} parent=1 // pred_region
      %s25 = ssub.s32 256, 256
      %26 = vsyncadd [#allocation6], %s25
      %s27 = sshll.u32 [#allocation5], 4
      %s28 = int_to_ptr.vmem [resolvable:$true] %s27
      %33 = dma.hbm_to_vmem [thread:$0]  %s1, 256, %s28, [#allocation6], 128, 128, 8
    $region9: #{tpu_custom_call.1} parent=1 // pred_fallthru
      _
    // Predicated region
    $region10: #{tpu_custom_call.1} parent=1 // pred_check
      _
    $region11: #{tpu_custom_call.1} parent=1 // pred_check_branch
      %35 = sbr.rel (0) target = $region13
    $region12: #{tpu_custom_call.1} parent=1 // pred_region
      %36 = dma.done [#allocation3], 256
    $region13: #{tpu_custom_call.1} parent=1 // pred_fallthru
      _
    // Predicated region
    $region14: #{tpu_custom_call.1} parent=1 // pred_check
      _
    $region15: #{tpu_custom_call.1} parent=1 // pred_check_branch
      %38 = sbr.rel (0) target = $region17
    $region16: #{tpu_custom_call.1} parent=1 // pred_region
      %39 = dma.done [#allocation6], 256
    $region17: #{tpu_custom_call.1} parent=1 // pred_fallthru
      _
    %v40 = vld [vmem:[#allocation2] sm:$0xff]
    %v41 = vld [vmem:[#allocation2 + $0x8] sm:$0xff]
    %v42 = vld [vmem:[#allocation5] sm:$0xff]
    %v43 = vld [vmem:[#allocation5 + $0x8] sm:$0xff]
    %v44 = vxor.u32 %v40, 2147483648
    %v45 = vxor.u32 %v41, 2147483648
    %v46 = vmul.f32 %v44, 1.442695
    %v47 = vpow.pop %v46
    %v48 = vmul.f32 %v45, 1.442695
    %v49 = vpow.pop %v48
    %v50 = vadd.f32 %v47, 1.0
    %v51 = vadd.f32 %v49, 1.0
    %v52 = vrcp.pop %v50
    %v53 = vmul.f32 1.0, %v52
    %v54 = vrcp.pop %v51
    %v55 = vmul.f32 1.0, %v54
    %v56 = vmax.f32 %v40, 0.0
    %v57 = vmax.f32 %v41, 0.0
    %v58 = vmul.f32 %v40, %v42
    %v59 = vmul.f32 %v41, %v43
    %v60 = vsub.f32 %v56, %v58
    %v61 = vsub.f32 %v57, %v59
    %vm62 = vcmp.ge.f32.partialorder %v40, 0.0
    %vm63 = vcmp.ge.f32.partialorder %v41, 0.0
    %v64 = vsub.f32 1.0, %v53
    %v65 = vsub.f32 1.0, %v55
    %v66 = vsel %vm62, %v53, %v64
    %v67 = vsel %vm63, %v55, %v65
    %v68 = vlog2.pop %v66
    %v69 = vmul.f32 %v68, 0.6931472
    %v70 = vlog2.pop %v67
    %v71 = vmul.f32 %v70, 0.6931472
    %v72 = vsub.f32 %v60, %v69
    %v73 = vsub.f32 %v61, %v71
    %v74 = vmul.f32 %v42, %v53
    %v75 = vmul.f32 %v43, %v55
    %v76 = vadd.f32 %v74, %v75
    %77 = vst [vmem:[#allocation7] sm:$0xff] %v76
    %v78 = vadd.f32 %v53, %v55
    %s79 = scalar_lea.vmem [#allocation7], 8
    %80 = vst [vmem:[%s79] sm:$0xff] %v78
    %v81 = vadd.f32 %v42, %v43
    %s82 = scalar_lea.vmem [#allocation7], 16
    %83 = vst [vmem:[%s82] sm:$0xff] %v81
    %v84 = vadd.f32 %v72, %v73
    %s85 = scalar_lea.vmem [#allocation7], 24
    %86 = vst [vmem:[%s85] sm:$0xff] %v84
    // Predicated region
    $region18: #{tpu_custom_call.1} parent=1 // pred_check
      _
    $region19: #{tpu_custom_call.1} parent=1 // pred_check_branch
      %88 = sbr.rel (0) target = $region21
    $region20: #{tpu_custom_call.1} parent=1 // pred_region
      %s90 = ssub.s32 512, 512
      %91 = vsyncadd [#allocation4], %s90
      %s92 = sshll.u32 [#allocation7], 4
      %s93 = int_to_ptr.vmem [resolvable:$true] %s92
      %98 = dma.vmem_to_hbm [thread:$0]  %s93, 512, %s2, [#allocation4], 128, 128, 8
    $region21: #{tpu_custom_call.1} parent=1 // pred_fallthru
      _
    // Predicated region
    $region22: #{tpu_custom_call.1} parent=1 // pred_check
      _
    $region23: #{tpu_custom_call.1} parent=1 // pred_check_branch
      %100 = sbr.rel (0) target = $region25
    $region24: #{tpu_custom_call.1} parent=1 // pred_region
      %101 = dma.done [#allocation4], 512
    $region25: #{tpu_custom_call.1} parent=1 // pred_fallthru
      _
    %102 = vsyncpa [#allocation3], 1
    %103 = vsyncpa [#allocation6], 1
    %104 = vsyncpa [#allocation4], 1

</llo_original>
